<compile_context>
chip_gen: v7x
topology: tpu7x:2x2x1
jax: 0.10.0
libtpu: 0.0.40
codegen_flags: <defaults>
</compile_context>

<pallas_src>
import jax
import jax.numpy as jnp
from jax.experimental import pallas as pl
from jax.experimental.pallas import tpu as pltpu


_ROW_TILE = 256    # sublane tile (multiple of 8)  -> block ~1 MiB in f32
_COL_TILE = 1024   # lane tile (multiple of 128)   -> lane-dense stores


def _sigmoid_kernel(x_ref, o_ref):
    # Elementwise sigmoid on the whole VMEM tile.
    # Compute in f32 (v5e has no bf16 VPU/EUP path); tanh routes to the EUP
    # slot, so no VPU divide is needed and compute stays hidden under DMA.
    x = x_ref[...].astype(jnp.float32)
    y = 0.5 * jnp.tanh(0.5 * x) + 0.5
    o_ref[...] = y.astype(o_ref.dtype)


def ben_forward(x: jax.Array) -> jax.Array:
    """Pallas equivalent of ben.forward: sigmoid(x), elementwise."""
    orig_shape = x.shape
    n = x.size
    if n == 0:
        return x

    flat = x.reshape(-1)

    # Lane-dense column width (multiple of 128).
    n_cols = _COL_TILE if n >= _COL_TILE else 128
    n_rows = -(-n // n_cols)  # cdiv

    # Row block: full height for small inputs (block == full dim is always
    # legal), otherwise a fixed 256-row tile so the grid pipelines and shards
    # across TensorCores.
    block_m = _ROW_TILE if n_rows >= _ROW_TILE else n_rows
    n_rows_pad = block_m * (-(-n_rows // block_m))

    padded_len = n_rows_pad * n_cols
    if padded_len != n:
        flat = jnp.pad(flat, (0, padded_len - n))
    x2d = flat.reshape(n_rows_pad, n_cols)

    grid_m = n_rows_pad // block_m
    itemsize = jnp.dtype(x.dtype).itemsize
    cost = pl.CostEstimate(
        flops=n,                        # the fused mul/add around tanh
        transcendentals=n,              # one tanh per element
        bytes_accessed=2 * n * itemsize,  # read + write, HBM-bandwidth bound
    )

    out2d = pl.pallas_call(
        _sigmoid_kernel,
        out_shape=jax.ShapeDtypeStruct((n_rows_pad, n_cols), x.dtype),
        grid=(grid_m,),
        in_specs=[pl.BlockSpec((block_m, n_cols), lambda i: (i, 0))],
        out_specs=pl.BlockSpec((block_m, n_cols), lambda i: (i, 0)),
        compiler_params=pltpu.CompilerParams(
            dimension_semantics=("parallel",),
            vmem_limit_bytes=32 * 1024 * 1024,
        ),
        cost_estimate=cost,
    )(x2d)

    return out2d.reshape(-1)[:n].reshape(orig_shape)


if __name__ == "__main__":
    # The exact example input from the PyTorch script.
    x_example = jnp.array([[1.0, -0.5], [-1.0, 3.0]], dtype=jnp.float32)

    key = jax.random.PRNGKey(0)
    k1, k2 = jax.random.split(key)
    # Odd-sized input: exercises the pad/flatten path.
    x_odd = jax.random.normal(k1, (64, 192), dtype=jnp.float32)
    # Multi-tile input: exercises the pipelined, parallel grid (grid_m = 2).
    x_big = jax.random.normal(k2, (512, 1024), dtype=jnp.float32)

    out1 = jax.block_until_ready(ben_forward(x_example))
    out2 = jax.block_until_ready(ben_forward(x_odd))
    out3 = jax.block_until_ready(ben_forward(x_big))

    # Correctness check against plain JAX sigmoid.
    assert jnp.allclose(out1, jax.nn.sigmoid(x_example), atol=1e-5), "mismatch (example)"
    assert jnp.allclose(out2, jax.nn.sigmoid(x_odd), atol=1e-5), "mismatch (odd)"
    assert jnp.allclose(out3, jax.nn.sigmoid(x_big), atol=1e-5), "mismatch (big)"

    print("KERNEL_OK")
</pallas_src>

<mosaic_0001>
module attributes {stable_mosaic.version = 11 : i64} {
  func.func @_sigmoid_kernel(%arg0: i32, %arg1: memref<1x128xf32, #tpu.memory_space<vmem>>, %arg2: memref<1x128xf32, #tpu.memory_space<vmem>>) attributes {dimension_semantics = [#tpu.dimension_semantics<parallel>], iteration_bounds = array<i64: 1>, scalar_prefetch = 0 : i64, scratch_operands = 0 : i64, tpu.core_type = #tpu.core_type<tc>, window_params = [{transform_indices = @transform_0, window_bounds = array<i64: 1, 128>}, {transform_indices = @transform_1, window_bounds = array<i64: 1, 128>}]} {
    %c0 = arith.constant 0 : index
    %c0_0 = arith.constant 0 : index
    %0 = vector.load %arg1[%c0, %c0_0] : memref<1x128xf32, #tpu.memory_space<vmem>>, vector<1x128xf32>
    %cst = arith.constant 5.000000e-01 : f32
    %1 = vector.broadcast %cst : f32 to vector<1x128xf32>
    %2 = arith.mulf %1, %0 : vector<1x128xf32>
    %3 = math.tanh %2 : vector<1x128xf32>
    %cst_1 = arith.constant 5.000000e-01 : f32
    %4 = vector.broadcast %cst_1 : f32 to vector<1x128xf32>
    %5 = arith.mulf %4, %3 : vector<1x128xf32>
    %cst_2 = arith.constant 5.000000e-01 : f32
    %6 = vector.broadcast %cst_2 : f32 to vector<1x128xf32>
    %7 = arith.addf %5, %6 : vector<1x128xf32>
    %c0_3 = arith.constant 0 : index
    %c0_4 = arith.constant 0 : index
    %8 = vector.load %arg2[%c0_3, %c0_4] : memref<1x128xf32, #tpu.memory_space<vmem>>, vector<1x128xf32>
    tpu.vector_store %arg2[%c0_3, %c0_4], %7 {strides = array<i32>} : memref<1x128xf32, #tpu.memory_space<vmem>>, vector<1x128xf32>,
    return
  }
  func.func @transform_0(%arg0: i32) -> (i32, i32) {
    %c0_i32 = arith.constant 0 : i32
    %c0_i32_0 = arith.constant 0 : i32
    return %arg0, %c0_i32 : i32, i32
  }
  func.func @transform_1(%arg0: i32) -> (i32, i32) {
    %c0_i32 = arith.constant 0 : i32
    %c0_i32_0 = arith.constant 0 : i32
    return %arg0, %c0_i32 : i32, i32
  }
}

</mosaic_0001>

<llo_original>
// kernel: tpu_custom_call.1
$region0: #{tpu_custom_call.1}
  #allocation0 [shape = 'u32[]', space=smem, size = 0x4, offset = 0x4, fixed_abs, tag = 'smem constant byte address 0x4 - core index']
  #allocation1 [shape = 'u32[144,128]{1,0:T(1,128)}', space=vmem, size = 0x12000, scoped, tag = 'internal scratch']
  %s0 = inlined_call_operand.hbm [shape: f32[1,128], index: 0, kind: input, shape index: {}]
  %s1 = inlined_call_operand.hbm [shape: f32[1,128], index: 1, kind: output, shape index: {}]
  %s2 = sld [smem:[#allocation0]]
  $region18: #{tpu_custom_call.1} parent=0
    _
  %s4 = ssub.s32 1, %s2
  %s5 = scalar_select 0, %s4, %s2
  $region1: #{tpu_custom_call.1} parent=0
    #allocation2 [shape = 'u8[512]{0}', space=vmem, size = 0x400, scoped, tag = 'input window, operand 0, single buffered']
    #allocation3 [shape = 's32[1]{0}', space=sflag, size = 0x4, scoped, tag = 'scoped memory for tpu_custom_call.1']
    #allocation4 [shape = 's32[1]{0}', space=sflag, size = 0x4, scoped, tag = 'scoped memory for tpu_custom_call.1']
    #allocation5 [shape = 'u8[512]{0}', space=vmem, size = 0x400, scoped, tag = 'output window, operand 0, single buffered']
    %6 = vsyncpa [#allocation3], 0
    %7 = vsyncpa [#allocation4], 0
    // Predicated region
    $region2: #{tpu_custom_call.1} parent=1 // pred_check
      _
    $region3: #{tpu_custom_call.1} parent=1 // pred_check_branch
      %9 = sbr.rel (0) target = $region5
    $region4: #{tpu_custom_call.1} parent=1 // pred_region
      %s11 = ssub.s32 16, 16
      %12 = vsyncadd [#allocation3], %s11
      %s14 = sshll.u32 [#allocation2], 4
      %s15 = int_to_ptr.vmem [resolvable:$true] %s14
      %17 = dma.hbm_to_vmem [thread:$0]  %s0, 16, %s15, [#allocation3]
    $region5: #{tpu_custom_call.1} parent=1 // pred_fallthru
      _
    // Predicated region
    $region6: #{tpu_custom_call.1} parent=1 // pred_check
      _
    $region7: #{tpu_custom_call.1} parent=1 // pred_check_branch
      %19 = sbr.rel (0) target = $region9
    $region8: #{tpu_custom_call.1} parent=1 // pred_region
      %20 = dma.done [#allocation3], 16
    $region9: #{tpu_custom_call.1} parent=1 // pred_fallthru
      _
    %v21 = vld [vmem:[#allocation2] sm:$0x1]
    %v22 = vmul.f32 %v21, 0.5
    %v23 = vtanh.pop %v22
    %v24 = vmul.f32 %v23, 0.5
    %v25 = vadd.f32 %v24, 0.5
    %26 = vst [vmem:[#allocation5] sm:$0x1] %v25
    // Predicated region
    $region10: #{tpu_custom_call.1} parent=1 // pred_check
      _
    $region11: #{tpu_custom_call.1} parent=1 // pred_check_branch
      %28 = sbr.rel (0) target = $region13
    $region12: #{tpu_custom_call.1} parent=1 // pred_region
      %s30 = ssub.s32 16, 16
      %31 = vsyncadd [#allocation4], %s30
      %s33 = sshll.u32 [#allocation5], 4
      %s34 = int_to_ptr.vmem [resolvable:$true] %s33
      %36 = dma.vmem_to_hbm [thread:$0]  %s34, 16, %s1, [#allocation4]
    $region13: #{tpu_custom_call.1} parent=1 // pred_fallthru
      _
    // Predicated region
    $region14: #{tpu_custom_call.1} parent=1 // pred_check
      _
    $region15: #{tpu_custom_call.1} parent=1 // pred_check_branch
      %38 = sbr.rel (0) target = $region17
    $region16: #{tpu_custom_call.1} parent=1 // pred_region
      %39 = dma.done [#allocation4], 16
    $region17: #{tpu_custom_call.1} parent=1 // pred_fallthru
      _
    %40 = vsyncpa [#allocation3], 1
    %41 = vsyncpa [#allocation4], 1

</llo_original>
